<compile_context>
chip_gen: v6e
topology: v6e:2x2x1
jax: 0.10.0
libtpu: 0.0.40
codegen_flags: <defaults>
</compile_context>

<pallas_src>
import numpy as np

import jax
import jax.numpy as jnp
from jax.experimental import pallas as pl
from jax.experimental.pallas import tpu as pltpu


def _pick_rows_per_block(n_batch, c_in, c_out, h, w, itemsize,
                         min_grid_steps=8, vmem_budget_bytes=24 << 20):
    """Input image rows (TH) handled per grid step.

    * H % TH == 0, and the input block lane dim TH*W must be %128 == 0 or the
      full H*W (layout rule); the output lane dim is then 4*TH*W.
    * double-buffered in/out blocks + f32 intermediates stay inside a VMEM
      budget that is comfortable on v7x (64 MiB physical VMEM).
    * prefer >= min_grid_steps grid steps (pipelining + v7x megacore); among
      those take the biggest tile (amortises ~0.35us/step, keeps stores dense).
    """
    def block_bytes(th):
        tm = th * w
        in_out = (2 * c_in * tm + 2 * c_out * 4 * tm) * itemsize   # 2x-buffered blocks
        scratch = 3 * c_out * 4 * tm * 4                           # f32 intermediates
        return in_out + scratch

    legal = [th for th in range(1, h + 1)
             if h % th == 0 and ((th * w) % 128 == 0 or th == h)]
    fitting = [th for th in legal if block_bytes(th) <= vmem_budget_bytes]
    if not fitting:
        fitting = [min(legal)]
    enough = [th for th in fitting if n_batch * (h // th) >= min_grid_steps]
    if enough:
        return max(enough)
    # TODO(synk): for maps whose H cannot be split 128-aligned (13x13 / 26x26)
    # with small N, add a C_out block axis to recover grid steps / megacore use.
    return min(fitting)


def _make_dup_matrix(th, w):
    """(TM, 4*TM) 0/1 nearest-neighbour duplication matrix (MXU fallback only)."""
    tm = th * w
    d = np.zeros((tm, 4 * tm), dtype=np.float32)
    m = np.arange(tm)
    j, x = m // w, m % w
    for r in (0, 1):
        for s in (0, 1):
            d[m, 4 * w * j + 2 * w * r + 2 * x + s] = 1.0
    return d


def _build_call(n, c_in, c_out, h, w, th, out_dtype, itemsize, use_mxu_dup):
    """Builds the pallas_call for either the primary (VPU dup) or fallback kernel."""
    tm = th * w
    num_tiles = h // th

    def conv_bn_act(x, w_mat, shift):
        # 1x1 conv (BN scale pre-folded into w_mat) on the MXU, lane dim = TM.
        y = jnp.dot(w_mat, x, preferred_element_type=jnp.float32)   # [C_out, TM]
        y = y + shift                                                # folded BN shift
        return jnp.maximum(y, 0.1 * y)                               # LeakyReLU(0.1)

    if use_mxu_dup:
        # Fallback (compile insurance): previous block-diagonal duplication matmul.
        def kernel(x_ref, w_ref, shift_ref, dup_ref, o_ref):
            y = conv_bn_act(x_ref[0], w_ref[...], shift_ref[...])
            up = jnp.dot(y, dup_ref[...], preferred_element_type=jnp.float32)
            o_ref[0] = up.astype(o_ref.dtype)
        extra_in_specs = [pl.BlockSpec((tm, 4 * tm), lambda i, t: (0, 0))]
        dup_flops = 2 * n * num_tiles * c_out * tm * (4 * tm)
        dup_bytes = tm * 4 * tm * 4
    else:
        # Primary: 2x2 nearest-neighbour duplication as pure data movement.
        # Produces the output tile already flat in final NCHW order, so the
        # store stays a single dense, lane-aligned full-block store.
        def kernel(x_ref, w_ref, shift_ref, o_ref):
            y = conv_bn_act(x_ref[0], w_ref[...], shift_ref[...])
            # width x2:  yw[c, 2x+s] = y[c, x]
            yw = jnp.broadcast_to(y[:, :, None], (c_out, tm, 2)).reshape(c_out, 2 * tm)
            # height x2: up[c, 4W*j + 2W*r + u] = yw[c, 2W*j + u]
            yw = yw.reshape(c_out, th, 1, 2 * w)
            up = jnp.broadcast_to(yw, (c_out, th, 2, 2 * w)).reshape(c_out, 4 * tm)
            o_ref[0] = up.astype(o_ref.dtype)
        extra_in_specs = []
        dup_flops = 0
        dup_bytes = 0

    cost = pl.CostEstimate(
        flops=2 * n * h * w * c_in * c_out + dup_flops,
        transcendentals=0,
        bytes_accessed=(n * c_in * h * w * itemsize            # input read
                        + n * c_out * 4 * h * w * itemsize     # output write (4x spatial)
                        + c_out * c_in * 4 + c_out * 4 + dup_bytes),
    )

    block_need = ((2 * c_in * tm + 2 * c_out * 4 * tm) * itemsize
                  + 4 * c_out * 4 * tm * 4 + c_out * c_in * 4 + 2 * dup_bytes)
    vmem_limit = int(min(64 << 20, max(32 << 20, 2 * block_need)))

    return pl.pallas_call(
        kernel,
        out_shape=jax.ShapeDtypeStruct((n, c_out, 4 * h * w), out_dtype),
        grid_spec=pltpu.PrefetchScalarGridSpec(
            num_scalar_prefetch=0,
            grid=(n, num_tiles),
            in_specs=[
                pl.BlockSpec((1, c_in, tm), lambda i, t: (i, 0, t)),
                pl.BlockSpec((c_out, c_in), lambda i, t: (0, 0)),
                pl.BlockSpec((c_out, 1), lambda i, t: (0, 0)),
            ] + extra_in_specs,
            out_specs=pl.BlockSpec((1, c_out, 4 * tm), lambda i, t: (i, 0, t)),
        ),
        compiler_params=pltpu.CompilerParams(
            dimension_semantics=("parallel", "parallel"),
            vmem_limit_bytes=vmem_limit,
        ),
        cost_estimate=cost,
    )


def upsample_forward(x_nchw, w_oc_ic, bn_scale, bn_shift, *, rows_per_block=None):
    """x_nchw: [N, C_in, H, W] -> [N, C_out, 2H, 2W] (matches the PyTorch module).

    w_oc_ic: [C_out, C_in] 1x1 conv weight (PyTorch weight[:, :, 0, 0]).
    bn_scale / bn_shift: folded eval-mode BatchNorm parameters, shape [C_out].
    """
    n, c_in, h, w = x_nchw.shape
    c_out = w_oc_ic.shape[0]
    itemsize = x_nchw.dtype.itemsize

    th = (rows_per_block if rows_per_block is not None
          else _pick_rows_per_block(n, c_in, c_out, h, w, itemsize))
    assert h % th == 0, (h, th)

    # Free, contiguous reshape + one-time (C_out-sized) parameter folding.
    x_flat = x_nchw.reshape(n, c_in, h * w)
    w_scaled = w_oc_ic.astype(jnp.float32) * bn_scale.astype(jnp.float32)[:, None]
    shift = bn_shift.reshape(c_out, 1).astype(jnp.float32)

    # NOTE: called eagerly so a lowering failure of the primary path (if any)
    # surfaces here and we fall back to the known-good MXU duplication kernel.
    try:
        call = _build_call(n, c_in, c_out, h, w, th, x_nchw.dtype, itemsize,
                           use_mxu_dup=False)
        out_flat = jax.block_until_ready(call(x_flat, w_scaled, shift))
    except Exception:
        dup = jnp.asarray(_make_dup_matrix(th, w))
        call = _build_call(n, c_in, c_out, h, w, th, x_nchw.dtype, itemsize,
                           use_mxu_dup=True)
        out_flat = jax.block_until_ready(call(x_flat, w_scaled, shift, dup))

    # Free contiguous reshape: flat [..., j, r, x, s] order == [2H, 2W] row-major.
    return out_flat.reshape(n, c_out, 2 * h, 2 * w)


def reference_forward(x_nchw, w_oc_ic, bn_scale, bn_shift):
    """Pure-JAX reference of the same computation (for correctness check)."""
    xf = x_nchw.astype(jnp.float32)
    y = jnp.einsum("oc,nchw->nohw", w_oc_ic.astype(jnp.float32), xf)
    y = y * bn_scale[None, :, None, None] + bn_shift[None, :, None, None]
    y = jnp.where(y > 0, y, 0.1 * y)
    y = jnp.repeat(jnp.repeat(y, 2, axis=2), 2, axis=3)     # nearest x2
    return y.astype(x_nchw.dtype)


if __name__ == "__main__":
    key = jax.random.PRNGKey(0)
    k_x, k_w, k_g, k_b, k_m, k_v = jax.random.split(key, 6)

    N, C_in, H, W = 2, 4, 16, 16
    C_out = 8

    x = jax.random.normal(k_x, (N, C_in, H, W), dtype=jnp.float32)

    # nn.Conv2d(in, out, 1, bias=False): weight (C_out, C_in, 1, 1) -> [C_out, C_in]
    w_torch = jax.random.normal(k_w, (C_out, C_in, 1, 1), dtype=jnp.float32) * 0.1
    w_mat = w_torch[:, :, 0, 0]

    # BatchNorm2d(C_out) eval-mode folding, eps = 1e-5
    gamma = 1.0 + 0.1 * jax.random.normal(k_g, (C_out,), dtype=jnp.float32)
    beta = 0.1 * jax.random.normal(k_b, (C_out,), dtype=jnp.float32)
    running_mean = 0.1 * jax.random.normal(k_m, (C_out,), dtype=jnp.float32)
    running_var = 1.0 + 0.1 * jnp.abs(jax.random.normal(k_v, (C_out,), dtype=jnp.float32))
    eps = 1e-5
    bn_scale = gamma / jnp.sqrt(running_var + eps)
    bn_shift = beta - running_mean * bn_scale

    out = upsample_forward(x, w_mat, bn_scale, bn_shift)
    out = jax.block_until_ready(out)

    ref = reference_forward(x, w_mat, bn_scale, bn_shift)
    assert out.shape == (N, C_out, 2 * H, 2 * W), out.shape
    assert jnp.allclose(out, ref, atol=1e-4, rtol=1e-4), "mismatch vs reference"

    print("KERNEL_OK")
</pallas_src>

<mosaic_0001>
module attributes {stable_mosaic.version = 11 : i64} {
  func.func @kernel(%arg0: i32, %arg1: i32, %arg2: memref<1x4x128xf32, #tpu.memory_space<vmem>>, %arg3: memref<8x4xf32, #tpu.memory_space<vmem>>, %arg4: memref<8x1xf32, #tpu.memory_space<vmem>>, %arg5: memref<1x8x512xf32, #tpu.memory_space<vmem>>) attributes {dimension_semantics = [#tpu.dimension_semantics<parallel>, #tpu.dimension_semantics<parallel>], iteration_bounds = array<i64: 2, 2>, scalar_prefetch = 0 : i64, scratch_operands = 0 : i64, tpu.core_type = #tpu.core_type<tc>, window_params = [{transform_indices = @transform_0, window_bounds = array<i64: 1, 4, 128>}, {pipeline_mode = #tpu.pipeline_mode<synchronous>, transform_indices = @transform_1, window_bounds = array<i64: 8, 4>}, {pipeline_mode = #tpu.pipeline_mode<synchronous>, transform_indices = @transform_2, window_bounds = array<i64: 8, 1>}, {transform_indices = @transform_3, window_bounds = array<i64: 1, 8, 512>}]} {
    %c0 = arith.constant 0 : index
    %c0_0 = arith.constant 0 : index
    %c0_1 = arith.constant 0 : index
    %0 = vector.load %arg2[%c0, %c0_0, %c0_1] : memref<1x4x128xf32, #tpu.memory_space<vmem>>, vector<1x4x128xf32>
    %1 = vector.shape_cast %0 : vector<1x4x128xf32> to vector<4x128xf32>
    %c0_2 = arith.constant 0 : index
    %c0_3 = arith.constant 0 : index
    %2 = vector.load %arg3[%c0_2, %c0_3] : memref<8x4xf32, #tpu.memory_space<vmem>>, vector<8x4xf32>
    %c0_4 = arith.constant 0 : index
    %c0_5 = arith.constant 0 : index
    %3 = vector.load %arg4[%c0_4, %c0_5] : memref<8x1xf32, #tpu.memory_space<vmem>>, vector<8x1xf32>
    %cst = arith.constant dense<0.000000e+00> : vector<8x128xf32>
    %4 = tpu.matmul %2, %1, %cst {dimension_numbers = #tpu.dot_dimension_numbers<[1], [0], [0], [1], [0, 0, 1, 1], [], []>} : vector<8x4xf32>, vector<4x128xf32>, vector<8x128xf32> -> vector<8x128xf32>
    %5 = vector.broadcast %3 : vector<8x1xf32> to vector<8x128xf32>
    %6 = arith.addf %4, %5 : vector<8x128xf32>
    %cst_6 = arith.constant 1.000000e-01 : f32
    %7 = vector.broadcast %cst_6 : f32 to vector<8x128xf32>
    %8 = arith.mulf %7, %6 : vector<8x128xf32>
    %9 = arith.maximumf %6, %8 : vector<8x128xf32>
    %10 = vector.shape_cast %9 : vector<8x128xf32> to vector<8x128x1xf32>
    %11 = vector.shape_cast %10 : vector<8x128x1xf32> to vector<8x128x1xf32>
    %12 = vector.broadcast %11 : vector<8x128x1xf32> to vector<8x128x2xf32>
    %13 = vector.shape_cast %12 : vector<8x128x2xf32> to vector<8x256xf32>
    %14 = vector.shape_cast %13 : vector<8x256xf32> to vector<8x8x1x32xf32>
    %15 = vector.shape_cast %14 : vector<8x8x1x32xf32> to vector<8x8x1x32xf32>
    %16 = vector.broadcast %15 : vector<8x8x1x32xf32> to vector<8x8x2x32xf32>
    %17 = vector.shape_cast %16 : vector<8x8x2x32xf32> to vector<8x512xf32>
    %c0_7 = arith.constant 0 : index
    %c0_8 = arith.constant 0 : index
    %c0_9 = arith.constant 0 : index
    %18 = vector.load %arg5[%c0_7, %c0_8, %c0_9] : memref<1x8x512xf32, #tpu.memory_space<vmem>>, vector<1x8x512xf32>
    %19 = vector.shape_cast %18 : vector<1x8x512xf32> to vector<8x512xf32>
    %20 = vector.shape_cast %17 : vector<8x512xf32> to vector<1x8x512xf32>
    tpu.vector_store %arg5[%c0_7, %c0_8, %c0_9], %20 {strides = array<i32>} : memref<1x8x512xf32, #tpu.memory_space<vmem>>, vector<1x8x512xf32>,
    return
  }
  func.func @transform_0(%arg0: i32, %arg1: i32) -> (i32, i32, i32) {
    %c0_i32 = arith.constant 0 : i32
    %c0_i32_0 = arith.constant 0 : i32
    return %arg0, %c0_i32, %arg1 : i32, i32, i32
  }
  func.func @transform_1(%arg0: i32, %arg1: i32) -> (i32, i32) {
    %c0_i32 = arith.constant 0 : i32
    %c0_i32_0 = arith.constant 0 : i32
    %c0_i32_1 = arith.constant 0 : i32
    return %c0_i32, %c0_i32_0 : i32, i32
  }
  func.func @transform_2(%arg0: i32, %arg1: i32) -> (i32, i32) {
    %c0_i32 = arith.constant 0 : i32
    %c0_i32_0 = arith.constant 0 : i32
    %c0_i32_1 = arith.constant 0 : i32
    return %c0_i32, %c0_i32_0 : i32, i32
  }
  func.func @transform_3(%arg0: i32, %arg1: i32) -> (i32, i32, i32) {
    %c0_i32 = arith.constant 0 : i32
    %c0_i32_0 = arith.constant 0 : i32
    return %arg0, %c0_i32, %arg1 : i32, i32, i32
  }
}

module attributes {stable_mosaic.version = 11 : i64} {
  func.func @kernel(%arg0: i32, %arg1: i32, %arg2: memref<1x4x128xf32, #tpu.memory_space<vmem>>, %arg3: memref<8x4xf32, #tpu.memory_space<vmem>>, %arg4: memref<8x1xf32, #tpu.memory_space<vmem>>, %arg5: memref<128x512xf32, #tpu.memory_space<vmem>>, %arg6: memref<1x8x512xf32, #tpu.memory_space<vmem>>) attributes {dimension_semantics = [#tpu.dimension_semantics<parallel>, #tpu.dimension_semantics<parallel>], iteration_bounds = array<i64: 2, 2>, scalar_prefetch = 0 : i64, scratch_operands = 0 : i64, tpu.core_type = #tpu.core_type<tc>, window_params = [{transform_indices = @transform_0, window_bounds = array<i64: 1, 4, 128>}, {pipeline_mode = #tpu.pipeline_mode<synchronous>, transform_indices = @transform_1, window_bounds = array<i64: 8, 4>}, {pipeline_mode = #tpu.pipeline_mode<synchronous>, transform_indices = @transform_2, window_bounds = array<i64: 8, 1>}, {pipeline_mode = #tpu.pipeline_mode<synchronous>, transform_indices = @transform_3, window_bounds = array<i64: 128, 512>}, {transform_indices = @transform_4, window_bounds = array<i64: 1, 8, 512>}]} {
    %c0 = arith.constant 0 : index
    %c0_0 = arith.constant 0 : index
    %c0_1 = arith.constant 0 : index
    %0 = vector.load %arg2[%c0, %c0_0, %c0_1] : memref<1x4x128xf32, #tpu.memory_space<vmem>>, vector<1x4x128xf32>
    %1 = vector.shape_cast %0 : vector<1x4x128xf32> to vector<4x128xf32>
    %c0_2 = arith.constant 0 : index
    %c0_3 = arith.constant 0 : index
    %2 = vector.load %arg3[%c0_2, %c0_3] : memref<8x4xf32, #tpu.memory_space<vmem>>, vector<8x4xf32>
    %c0_4 = arith.constant 0 : index
    %c0_5 = arith.constant 0 : index
    %3 = vector.load %arg4[%c0_4, %c0_5] : memref<8x1xf32, #tpu.memory_space<vmem>>, vector<8x1xf32>
    %cst = arith.constant dense<0.000000e+00> : vector<8x128xf32>
    %4 = tpu.matmul %2, %1, %cst {dimension_numbers = #tpu.dot_dimension_numbers<[1], [0], [0], [1], [0, 0, 1, 1], [], []>} : vector<8x4xf32>, vector<4x128xf32>, vector<8x128xf32> -> vector<8x128xf32>
    %5 = vector.broadcast %3 : vector<8x1xf32> to vector<8x128xf32>
    %6 = arith.addf %4, %5 : vector<8x128xf32>
    %cst_6 = arith.constant 1.000000e-01 : f32
    %7 = vector.broadcast %cst_6 : f32 to vector<8x128xf32>
    %8 = arith.mulf %7, %6 : vector<8x128xf32>
    %9 = arith.maximumf %6, %8 : vector<8x128xf32>
    %c0_7 = arith.constant 0 : index
    %c0_8 = arith.constant 0 : index
    %10 = vector.load %arg5[%c0_7, %c0_8] : memref<128x512xf32, #tpu.memory_space<vmem>>, vector<128x512xf32>
    %cst_9 = arith.constant dense<0.000000e+00> : vector<8x512xf32>
    %11 = tpu.matmul %9, %10, %cst_9 {dimension_numbers = #tpu.dot_dimension_numbers<[1], [0], [0], [1], [0, 0, 1, 1], [], []>} : vector<8x128xf32>, vector<128x512xf32>, vector<8x512xf32> -> vector<8x512xf32>
    %c0_10 = arith.constant 0 : index
    %c0_11 = arith.constant 0 : index
    %c0_12 = arith.constant 0 : index
    %12 = vector.load %arg6[%c0_10, %c0_11, %c0_12] : memref<1x8x512xf32, #tpu.memory_space<vmem>>, vector<1x8x512xf32>
    %13 = vector.shape_cast %12 : vector<1x8x512xf32> to vector<8x512xf32>
    %14 = vector.shape_cast %11 : vector<8x512xf32> to vector<1x8x512xf32>
    tpu.vector_store %arg6[%c0_10, %c0_11, %c0_12], %14 {strides = array<i32>} : memref<1x8x512xf32, #tpu.memory_space<vmem>>, vector<1x8x512xf32>,
    return
  }
  func.func @transform_0(%arg0: i32, %arg1: i32) -> (i32, i32, i32) {
    %c0_i32 = arith.constant 0 : i32
    %c0_i32_0 = arith.constant 0 : i32
    return %arg0, %c0_i32, %arg1 : i32, i32, i32
  }
  func.func @transform_1(%arg0: i32, %arg1: i32) -> (i32, i32) {
    %c0_i32 = arith.constant 0 : i32
    %c0_i32_0 = arith.constant 0 : i32
    %c0_i32_1 = arith.constant 0 : i32
    return %c0_i32, %c0_i32_0 : i32, i32
  }
  func.func @transform_2(%arg0: i32, %arg1: i32) -> (i32, i32) {
    %c0_i32 = arith.constant 0 : i32
    %c0_i32_0 = arith.constant 0 : i32
    %c0_i32_1 = arith.constant 0 : i32
    return %c0_i32, %c0_i32_0 : i32, i32
  }
  func.func @transform_3(%arg0: i32, %arg1: i32) -> (i32, i32) {
    %c0_i32 = arith.constant 0 : i32
    %c0_i32_0 = arith.constant 0 : i32
    %c0_i32_1 = arith.constant 0 : i32
    return %c0_i32, %c0_i32_0 : i32, i32
  }
  func.func @transform_4(%arg0: i32, %arg1: i32) -> (i32, i32, i32) {
    %c0_i32 = arith.constant 0 : i32
    %c0_i32_0 = arith.constant 0 : i32
    return %arg0, %c0_i32, %arg1 : i32, i32, i32
  }
}

</mosaic_0001>

<llo_original>
// kernel: tpu_custom_call.1
$region0: #{tpu_custom_call.1}
  #allocation0 [shape = 'u32[]', space=smem, size = 0x4, offset = 0x4, fixed_abs, tag = 'smem constant byte address 0x4 - core index']
  #allocation1 [shape = 'u32[144,128]{1,0:T(1,128)}', space=vmem, size = 0x12000, scoped, tag = 'internal scratch']
  %s0 = inlined_call_operand.vmem [shape: f32[2,4,256], index: 0, kind: input, shape index: {}]
  %s1 = inlined_call_operand.vmem [shape: f32[8,4], index: 1, kind: input, shape index: {}]
  %s2 = inlined_call_operand.vmem [shape: f32[8,1], index: 2, kind: input, shape index: {}]
  %s3 = inlined_call_operand.hbm [shape: f32[128,512], index: 3, kind: input, shape index: {}]
  %s4 = inlined_call_operand.hbm [shape: f32[2,8,1024], index: 4, kind: output, shape index: {}]
  %s5 = sld [smem:[#allocation0]]
  $region53: #{tpu_custom_call.1} parent=0
    _
  %s7 = ssub.s32 1, %s5
  %s8 = scalar_select 0, %s7, %s5
  $region1: #{tpu_custom_call.1} parent=0
    #allocation2 [shape = 'u8[262144]{0}', space=vmem, size = 0x40000, scoped, tag = 'input window, operand 3, single buffered']
    #allocation3 [shape = 's32[2]{0}', space=sflag, size = 0x8, scoped, tag = 'scoped memory for tpu_custom_call.1']
    #allocation4 [shape = 's32[2]{0}', space=sflag, size = 0x8, scoped, tag = 'scoped memory for tpu_custom_call.1']
    #allocation5 [shape = 'u8[32768]{0}', space=vmem, size = 0x8000, scoped, tag = 'output window, operand 0']
    %9 = vsyncpa [#allocation3], 0
    %10 = vsyncpa [#allocation4], 0
    %s11 = scalar_lea.sflag [#allocation4], 1
    %12 = vsyncpa %s11, 0
    loop: start=0, step=1, limit=6
    $region2: #{tpu_custom_call.1} parent=1 // loop_pre_header
      _
    $region3: #{tpu_custom_call.1} parent=1 // loop_header
      %s14 = sphi 0, %s18
      %p15 = scmp.ge.s32.totalorder %s14, 6
      %s21 = sphi 0, %s33
      %s22 = sphi 0, %s29
      %s23 = sphi 0, %s21
      %s24 = sphi 0, %s22
      %s25 = sphi 0, %s23
      %s26 = sphi 0, %s24
      %s38 = sphi 0, %s40
      %s41 = sphi 0, %s38
      %s42 = sphi 0, %s41
      %s58 = sphi 0, %s42
      %s62 = sphi 0, %s62
      %s64 = sphi 0, %s62
      %s65 = sphi 0, %s64
      %s79 = sphi 0, %s65
      %s83 = sphi 0, %s83
      %s85 = sphi 0, %s83
      %s86 = sphi 0, %s85
      %s100 = sphi 0, %s86
      %s104 = sphi 0, %s104
      %s106 = sphi 0, %s104
      %s107 = sphi 0, %s106
      %s121 = sphi 0, %s107
      %s129 = sphi 0, %s131
      %s132 = sphi 0, %s129
      %s133 = sphi 0, %s132
      %s149 = sphi 0, %s133
    $region4: #{tpu_custom_call.1} parent=1 // loop_header_branch
      %17 = sbr.rel (%p15) target = $region8
    $region5: #{tpu_custom_call.1} parent=1 // loop_body
      %s19 = ssub.s32 %s14, 1
      %s20 = ssub.s32 %s14, 2
      %s27 = sadd.s32 1, %s22
      %p28 = scmp.ge.s32.totalorder %s27, 2
      %s29 = scalar_select %p28, 0, %s27
      %s30 = sadd.s32 1, %s21
      %s31 = scalar_select %p28, %s30, %s21
      %p32 = scmp.ge.s32.totalorder %s31, 2
      %s33 = scalar_select %p32, 0, %s31
      %s34 = ssub.s32 %s21, %s33
      %s35 = ssub.s32 %s22, %s29
      %s36 = sor.u32 %s34, %s35
      %p37 = scmp.eq.s32.totalorder %s36, 0
      %s39 = sadd.s32 %s38, 1
      %s40 = scalar_select %p37, %s38, %s39
      %p43 = pneg %p37
      %p44 = scmp.eq.s32.totalorder %s14, 3
      %p45 = por %p43, %p44
      %p46 = scmp.ne.s32.totalorder %s38, %s41
      %p47 = scmp.eq.s32.totalorder %s14, 0
      %p48 = por %p46, %p47
      %p49 = scmp.ne.s32.totalorder %s38, %s41
      %p50 = scmp.eq.s32.totalorder %s19, 3
      %p51 = por %p49, %p50
      %p52 = scmp.ne.s32.totalorder %s41, %s42
      %p53 = scmp.eq.s32.totalorder %s19, 0
      %p54 = por %p52, %p53
      %p55 = scmp.ne.s32.totalorder %s41, %s42
      %p56 = scmp.eq.s32.totalorder %s20, 3
      %p57 = por %p55, %p56
      %p59 = scmp.ne.s32.totalorder %s42, %s58
      %p60 = scmp.eq.s32.totalorder %s20, 0
      %p61 = por %p59, %p60
      %s63 = sadd.s32 %s62, 1
      %p66 = scmp.eq.s32.totalorder %s14, 3
      %p67 = scmp.ne.s32.totalorder %s62, %s64
      %p68 = scmp.eq.s32.totalorder %s14, 0
      %p69 = por %p67, %p68
      %p70 = scmp.ne.s32.totalorder %s62, %s64
      %p71 = scmp.eq.s32.totalorder %s19, 3
      %p72 = por %p70, %p71
      %p73 = scmp.ne.s32.totalorder %s64, %s65
      %p74 = scmp.eq.s32.totalorder %s19, 0
      %p75 = por %p73, %p74
      %p76 = scmp.ne.s32.totalorder %s64, %s65
      %p77 = scmp.eq.s32.totalorder %s20, 3
      %p78 = por %p76, %p77
      %p80 = scmp.ne.s32.totalorder %s65, %s79
      %p81 = scmp.eq.s32.totalorder %s20, 0
      %p82 = por %p80, %p81
      %s84 = sadd.s32 %s83, 1
      %p87 = scmp.eq.s32.totalorder %s14, 3
      %p88 = scmp.ne.s32.totalorder %s83, %s85
      %p89 = scmp.eq.s32.totalorder %s14, 0
      %p90 = por %p88, %p89
      %p91 = scmp.ne.s32.totalorder %s83, %s85
      %p92 = scmp.eq.s32.totalorder %s19, 3
      %p93 = por %p91, %p92
      %p94 = scmp.ne.s32.totalorder %s85, %s86
      %p95 = scmp.eq.s32.totalorder %s19, 0
      %p96 = por %p94, %p95
      %p97 = scmp.ne.s32.totalorder %s85, %s86
      %p98 = scmp.eq.s32.totalorder %s20, 3
      %p99 = por %p97, %p98
      %p101 = scmp.ne.s32.totalorder %s86, %s100
      %p102 = scmp.eq.s32.totalorder %s20, 0
      %p103 = por %p101, %p102
      %s105 = sadd.s32 %s104, 1
      %p108 = scmp.eq.s32.totalorder %s14, 3
      %p109 = scmp.ne.s32.totalorder %s104, %s106
      %p110 = scmp.eq.s32.totalorder %s14, 0
      %p111 = por %p109, %p110
      %p112 = scmp.ne.s32.totalorder %s104, %s106
      %p113 = scmp.eq.s32.totalorder %s19, 3
      %p114 = por %p112, %p113
      %p115 = scmp.ne.s32.totalorder %s106, %s107
      %p116 = scmp.eq.s32.totalorder %s19, 0
      %p117 = por %p115, %p116
      %p118 = scmp.ne.s32.totalorder %s106, %s107
      %p119 = scmp.eq.s32.totalorder %s20, 3
      %p120 = por %p118, %p119
      %p122 = scmp.ne.s32.totalorder %s107, %s121
      %p123 = scmp.eq.s32.totalorder %s20, 0
      %p124 = por %p122, %p123
      %s125 = ssub.s32 %s21, %s33
      %s126 = ssub.s32 %s22, %s29
      %s127 = sor.u32 %s125, %s126
      %p128 = scmp.eq.s32.totalorder %s127, 0
      %s130 = sadd.s32 %s129, 1
      %s131 = scalar_select %p128, %s129, %s130
      %p134 = pneg %p128
      %p135 = scmp.eq.s32.totalorder %s14, 3
      %p136 = por %p134, %p135
      %p137 = scmp.ne.s32.totalorder %s129, %s132
      %p138 = scmp.eq.s32.totalorder %s14, 0
      %p139 = por %p137, %p138
      %p140 = scmp.ne.s32.totalorder %s129, %s132
      %p141 = scmp.eq.s32.totalorder %s19, 3
      %p142 = por %p140, %p141
      %p143 = scmp.ne.s32.totalorder %s132, %s133
      %p144 = scmp.eq.s32.totalorder %s19, 0
      %p145 = por %p143, %p144
      %p146 = scmp.ne.s32.totalorder %s132, %s133
      %p147 = scmp.eq.s32.totalorder %s20, 3
      %p148 = por %p146, %p147
      %p150 = scmp.ne.s32.totalorder %s133, %s149
      %p151 = scmp.eq.s32.totalorder %s20, 0
      %p152 = por %p150, %p151
      %p153 = scmp.le.s32.totalorder 1, %s14
      %p154 = scmp.lt.s32.totalorder %s14, 5
      %p155 = pnand %p153, %p154
      %p156 = pneg %p155
      // Predicated region
      $region9: #{tpu_custom_call.1} parent=5 // pred_check
        _
      $region10: #{tpu_custom_call.1} parent=5 // pred_check_branch
        %158 = sbr.rel (%p155) target = $region12
      $region11: #{tpu_custom_call.1} parent=5 // pred_region
        %s159 = ssub.s32 %s14, 1
        // Predicated region
        $region13: #{tpu_custom_call.1} parent=11 // pred_check
          %p160 = pneg %p75
        $region14: #{tpu_custom_call.1} parent=11 // pred_check_branch
          %162 = sbr.rel (%p160) target = $region16
        $region15: #{tpu_custom_call.1} parent=11 // pred_region
          _
        $region16: #{tpu_custom_call.1} parent=11 // pred_fallthru
          _
        // Predicated region
        $region17: #{tpu_custom_call.1} parent=11 // pred_check
          %p163 = pneg %p96
        $region18: #{tpu_custom_call.1} parent=11 // pred_check_branch
          %165 = sbr.rel (%p163) target = $region20
        $region19: #{tpu_custom_call.1} parent=11 // pred_region
          _
        $region20: #{tpu_custom_call.1} parent=11 // pred_fallthru
          _
        // Predicated region
        $region21: #{tpu_custom_call.1} parent=11 // pred_check
          %p166 = pneg %p117
        $region22: #{tpu_custom_call.1} parent=11 // pred_check_branch
          %168 = sbr.rel (%p166) target = $region24
        $region23: #{tpu_custom_call.1} parent=11 // pred_region
          %s170 = ssub.s32 8192, 8192
          %171 = vsyncadd [#allocation3], %s170
          %s172 = sshll.u32 [#allocation2], 4
          %s173 = int_to_ptr.vmem [resolvable:$true] %s172
          %178 = dma.hbm_to_vmem [thread:$0]  %s3, 8192, %s173, [#allocation3], 512, 512, 32
        $region24: #{tpu_custom_call.1} parent=11 // pred_fallthru
          _
      $region12: #{tpu_custom_call.1} parent=5 // pred_fallthru
        _
      %p179 = scmp.lt.s32.totalorder %s14, 4
      // Predicated region
      $region25: #{tpu_custom_call.1} parent=5 // pred_check
        %p180 = pneg %p179
      $region26: #{tpu_custom_call.1} parent=5 // pred_check_branch
        %182 = sbr.rel (%p180) target = $region28
      $region27: #{tpu_custom_call.1} parent=5 // pred_region
        // Predicated region
        $region29: #{tpu_custom_call.1} parent=27 // pred_check
          %p183 = pneg %p48
        $region30: #{tpu_custom_call.1} parent=27 // pred_check_branch
          %185 = sbr.rel (%p183) target = $region32
        $region31: #{tpu_custom_call.1} parent=27 // pred_region
          %p186 = scmp.lt.s32.totalorder %s21, 1
          %s187 = scalar_select %p186, %s21, 1
          %p188 = scmp.lt.s32.totalorder %s22, 1
          %s189 = scalar_select %p188, %s22, 1
          %s190 = smul.addr %s187, 2
          %s191 = sadd.s32 %s189, %s190
          %s192 = smul.addr %s191, 4
          %s193 = scalar_lea.vmem %s0, %s192
        $region32: #{tpu_custom_call.1} parent=27 // pred_fallthru
          _
      $region28: #{tpu_custom_call.1} parent=5 // pred_fallthru
        _
      %p194 = scmp.le.s32.totalorder 1, %s14
      %p195 = scmp.lt.s32.totalorder %s14, 5
      %p196 = pnand %p194, %p195
      %p197 = pneg %p196
      // Predicated region
      $region33: #{tpu_custom_call.1} parent=5 // pred_check
        _
      $region34: #{tpu_custom_call.1} parent=5 // pred_check_branch
        %199 = sbr.rel (%p196) target = $region36
      $region35: #{tpu_custom_call.1} parent=5 // pred_region
        %s200 = ssub.s32 %s14, 1
        // Predicated region
        $region37: #{tpu_custom_call.1} parent=35 // pred_check
          %p201 = pneg %p117
        $region38: #{tpu_custom_call.1} parent=35 // pred_check_branch
          %203 = sbr.rel (%p201) target = $region40
        $region39: #{tpu_custom_call.1} parent=35 // pred_region
          %204 = dma.done [#allocation3], 8192
        $region40: #{tpu_custom_call.1} parent=35 // pred_fallthru
          _
        %p205 = scmp.lt.s32.totalorder %s23, 1
        %s206 = scalar_select %p205, %s23, 1
        %p207 = scmp.lt.s32.totalorder %s24, 1
        %s208 = scalar_select %p207, %s24, 1
        %s209 = smul.addr %s206, 2
        %s210 = sadd.s32 %s208, %s209
        %s211 = smul.addr %s210, 4
        %s212 = scalar_lea.vmem %s0, %s211
        %p213 = pneg %p54
        %p214 = pneg %p51
        %p215 = pneg %p75
        %p216 = pneg %p72
        %p217 = pneg %p96
        %p218 = pneg %p93
        %p219 = pneg %p117
        %p220 = pneg %p114
        %p221 = pneg %p145
        %p222 = pneg %p142
        %s223 = sand.u32 %s132, 1
        %s224 = scalar_lea.sflag [#allocation4], %s223
        %s225 = sand.u32 %s132, 1
        %s226 = smul.addr %s225, 32
        %s227 = scalar_lea.vmem [#allocation5], %s226
        %p228 = scmp.lt.s32.totalorder %s23, 1
        %s229 = scalar_select %p228, %s23, 1
        %p230 = scmp.lt.s32.totalorder %s24, 1
        %s231 = scalar_select %p230, %s24, 1
        %s232 = smul.addr %s229, 2
        %s233 = sadd.s32 %s231, %s232
        %s234 = smul.addr %s233, 4
        %s235 = scalar_lea.vmem %s0, %s234
        %s236 = smul.u32 4, %s24
        %v237 = vld [vmem:[%s235] sm:$0xf]
        %v238 = vld [vmem:[%s1] sm:$0xff]
        %v239 = vld [vmem:[%s2] sm:$0xff]
        %241 = vset.pattern.permute.xlu0 0
        %242 = vperm.xlu0 %241, %v239
        %v243 = vpop.permute.xlu0 %242
        %vm245 = vcmask 31744
        %v247 = vsel %vm245, %v238, 0
        %vm249 = vcmask 1043456
        %v251 = vsel %vm249, %v237, 0
        %253 = vmatprep.subr.mxu0 0.0
        %254 = vmatpush1.msra.mxu0 0.0
        %255 = vmatprep.subr.mxu0 0.0
        %256 = vmatpush1.msra.mxu0 0.0
        %257 = vmatprep.subr.mxu0 0.0
        %258 = vmatpush1.msra.mxu0 0.0
        %259 = vmatprep.subr.mxu0 0.0
        %260 = vmatpush1.msra.mxu0 0.0
        %261 = vmatprep.subr.mxu0 0.0
        %262 = vmatpush1.msra.mxu0 0.0
        %263 = vmatprep.subr.mxu0 0.0
        %264 = vmatpush1.msra.mxu0 0.0
        %265 = vmatprep.subr.mxu0 0.0
        %266 = vmatpush1.msra.mxu0 0.0
        %267 = vmatprep.subr.mxu0 0.0
        %268 = vmatpush1.msra.mxu0 0.0
        %269 = vmatprep.subr.mxu0 0.0
        %270 = vmatpush1.msra.mxu0 0.0
        %271 = vmatprep.subr.mxu0 0.0
        %272 = vmatpush1.msra.mxu0 0.0
        %273 = vmatprep.subr.mxu0 0.0
        %274 = vmatpush1.msra.mxu0 0.0
        %275 = vmatprep.subr.mxu0 0.0
        %276 = vmatpush1.msra.mxu0 0.0
        %277 = vmatprep.subr.mxu0 0.0
        %278 = vmatpush1.msra.mxu0 0.0
        %279 = vmatprep.subr.mxu0 0.0
        %280 = vmatpush1.msra.mxu0 0.0
        %281 = vmatprep.subr.mxu0 0.0
        %282 = vmatpush1.msra.mxu0 0.0
        %283 = vmatprep.subr.mxu0 0.0
        %284 = vmatpush1.msra.mxu0 %v251
        %285 = vmatprep.subr.mxu0 0.0
        %286 = vmatpush2.msra.mxu0 0.0
        %287 = vmatprep.subr.mxu0 0.0
        %288 = vmatpush2.msra.mxu0 0.0
        %289 = vmatprep.subr.mxu0 0.0
        %290 = vmatpush2.msra.mxu0 0.0
        %291 = vmatprep.subr.mxu0 0.0
        %292 = vmatpush2.msra.mxu0 0.0
        %293 = vmatprep.subr.mxu0 0.0
        %294 = vmatpush2.msra.mxu0 0.0
        %295 = vmatprep.subr.mxu0 0.0
        %296 = vmatpush2.msra.mxu0 0.0
        %297 = vmatprep.subr.mxu0 0.0
        %298 = vmatpush2.msra.mxu0 0.0
        %299 = vmatprep.subr.mxu0 0.0
        %300 = vmatpush2.msra.mxu0 0.0
        %301 = vmatprep.subr.mxu0 0.0
        %302 = vmatpush2.msra.mxu0 0.0
        %303 = vmatprep.subr.mxu0 0.0
        %304 = vmatpush2.msra.mxu0 0.0
        %305 = vmatprep.subr.mxu0 0.0
        %306 = vmatpush2.msra.mxu0 0.0
        %307 = vmatprep.subr.mxu0 0.0
        %308 = vmatpush2.msra.mxu0 0.0
        %309 = vmatprep.subr.mxu0 0.0
        %310 = vmatpush2.msra.mxu0 0.0
        %311 = vmatprep.subr.mxu0 0.0
        %312 = vmatpush2.msra.mxu0 0.0
        %313 = vmatprep.subr.mxu0 0.0
        %314 = vmatpush2.msra.mxu0 0.0
        %315 = vmatprep.subr.mxu0 0.0
        %316 = vmatpush2.msra.mxu0 0.0
        %317 = vmatprep.mubr.f32.mxu0 0.0
        %318 = vmatmul.mubr.f32.gmra.mxu0 %v247
        %v319 = vpop.f32.mrf.mxu0
        %v320 = vadd.f32 %v243, %v319
        %v321 = vpop.f32.mrf.mxu0
        %322 = vdwg.mxu0
        %v323 = vmul.f32 %v320, 0.1
        %v324 = vmax.f32 %v320, %v323
        %v325 = vld [vmem:[#allocation2] sm:$0xff]
        %v326 = vld [vmem:[#allocation2 + $0x8] sm:$0xff]
        %v327 = vld [vmem:[#allocation2 + $0x10] sm:$0xff]
        %v328 = vld [vmem:[#allocation2 + $0x18] sm:$0xff]
        %v329 = vld [vmem:[#allocation2 + $0x20] sm:$0xff]
        %v330 = vld [vmem:[#allocation2 + $0x28] sm:$0xff]
        %v331 = vld [vmem:[#allocation2 + $0x30] sm:$0xff]
        %v332 = vld [vmem:[#allocation2 + $0x38] sm:$0xff]
        %v333 = vld [vmem:[#allocation2 + $0x40] sm:$0xff]
        %v334 = vld [vmem:[#allocation2 + $0x48] sm:$0xff]
        %v335 = vld [vmem:[#allocation2 + $0x50] sm:$0xff]
        %v336 = vld [vmem:[#allocation2 + $0x58] sm:$0xff]
        %v337 = vld [vmem:[#allocation2 + $0x60] sm:$0xff]
        %v338 = vld [vmem:[#allocation2 + $0x68] sm:$0xff]
        %v339 = vld [vmem:[#allocation2 + $0x70] sm:$0xff]
        %v340 = vld [vmem:[#allocation2 + $0x78] sm:$0xff]
        %v341 = vld [vmem:[#allocation2 + $0x80] sm:$0xff]
        %v342 = vld [vmem:[#allocation2 + $0x88] sm:$0xff]
        %v343 = vld [vmem:[#allocation2 + $0x90] sm:$0xff]
        %v344 = vld [vmem:[#allocation2 + $0x98] sm:$0xff]
        %v345 = vld [vmem:[#allocation2 + $0xa0] sm:$0xff]
        %v346 = vld [vmem:[#allocation2 + $0xa8] sm:$0xff]
        %v347 = vld [vmem:[#allocation2 + $0xb0] sm:$0xff]
        %v348 = vld [vmem:[#allocation2 + $0xb8] sm:$0xff]
        %v349 = vld [vmem:[#allocation2 + $0xc0] sm:$0xff]
        %v350 = vld [vmem:[#allocation2 + $0xc8] sm:$0xff]
        %v351 = vld [vmem:[#allocation2 + $0xd0] sm:$0xff]
        %v352 = vld [vmem:[#allocation2 + $0xd8] sm:$0xff]
        %v353 = vld [vmem:[#allocation2 + $0xe0] sm:$0xff]
        %v354 = vld [vmem:[#allocation2 + $0xe8] sm:$0xff]
        %v355 = vld [vmem:[#allocation2 + $0xf0] sm:$0xff]
        %v356 = vld [vmem:[#allocation2 + $0xf8] sm:$0xff]
        %v357 = vld [vmem:[#allocation2 + $0x100] sm:$0xff]
        %v358 = vld [vmem:[#allocation2 + $0x108] sm:$0xff]
        %v359 = vld [vmem:[#allocation2 + $0x110] sm:$0xff]
        %v360 = vld [vmem:[#allocation2 + $0x118] sm:$0xff]
        %v361 = vld [vmem:[#allocation2 + $0x120] sm:$0xff]
        %v362 = vld [vmem:[#allocation2 + $0x128] sm:$0xff]
        %v363 = vld [vmem:[#allocation2 + $0x130] sm:$0xff]
        %v364 = vld [vmem:[#allocation2 + $0x138] sm:$0xff]
        %v365 = vld [vmem:[#allocation2 + $0x140] sm:$0xff]
        %v366 = vld [vmem:[#allocation2 + $0x148] sm:$0xff]
        %v367 = vld [vmem:[#allocation2 + $0x150] sm:$0xff]
        %v368 = vld [vmem:[#allocation2 + $0x158] sm:$0xff]
        %v369 = vld [vmem:[#allocation2 + $0x160] sm:$0xff]
        %v370 = vld [vmem:[#allocation2 + $0x168] sm:$0xff]
        %v371 = vld [vmem:[#allocation2 + $0x170] sm:$0xff]
        %v372 = vld [vmem:[#allocation2 + $0x178] sm:$0xff]
        %v373 = vld [vmem:[#allocation2 + $0x180] sm:$0xff]
        %v374 = vld [vmem:[#allocation2 + $0x188] sm:$0xff]
        %v375 = vld [vmem:[#allocation2 + $0x190] sm:$0xff]
        %v376 = vld [vmem:[#allocation2 + $0x198] sm:$0xff]
        %v377 = vld [vmem:[#allocation2 + $0x1a0] sm:$0xff]
        %v378 = vld [vmem:[#allocation2 + $0x1a8] sm:$0xff]
        %v379 = vld [vmem:[#allocation2 + $0x1b0] sm:$0xff]
        %v380 = vld [vmem:[#allocation2 + $0x1b8] sm:$0xff]
        %v381 = vld [vmem:[#allocation2 + $0x1c0] sm:$0xff]
        %v382 = vld [vmem:[#allocation2 + $0x1c8] sm:$0xff]
        %v383 = vld [vmem:[#allocation2 + $0x1d0] sm:$0xff]
        %v384 = vld [vmem:[#allocation2 + $0x1d8] sm:$0xff]
        %v385 = vld [vmem:[#allocation2 + $0x1e0] sm:$0xff]
        %v386 = vld [vmem:[#allocation2 + $0x1e8] sm:$0xff]
        %v387 = vld [vmem:[#allocation2 + $0x1f0] sm:$0xff]
        %v388 = vld [vmem:[#allocation2 + $0x1f8] sm:$0xff]
        %389 = vmatprep.subr.mxu0 %v386
        %390 = vmatpush1.msra.mxu0 %v385
        %391 = vmatprep.subr.mxu0 %v382
        %392 = vmatpush1.msra.mxu0 %v381
        %393 = vmatprep.subr.mxu0 %v378
        %394 = vmatpush1.msra.mxu0 %v377
        %395 = vmatprep.subr.mxu0 %v374
        %396 = vmatpush1.msra.mxu0 %v373
        %397 = vmatprep.subr.mxu0 %v370
        %398 = vmatpush1.msra.mxu0 %v369
        %399 = vmatprep.subr.mxu0 %v366
        %400 = vmatpush1.msra.mxu0 %v365
        %401 = vmatprep.subr.mxu0 %v362
        %402 = vmatpush1.msra.mxu0 %v361
        %403 = vmatprep.subr.mxu0 %v358
        %404 = vmatpush1.msra.mxu0 %v357
        %405 = vmatprep.subr.mxu0 %v354
        %406 = vmatpush1.msra.mxu0 %v353
        %407 = vmatprep.subr.mxu0 %v350
        %408 = vmatpush1.msra.mxu0 %v349
        %409 = vmatprep.subr.mxu0 %v346
        %410 = vmatpush1.msra.mxu0 %v345
        %411 = vmatprep.subr.mxu0 %v342
        %412 = vmatpush1.msra.mxu0 %v341
        %413 = vmatprep.subr.mxu0 %v338
        %414 = vmatpush1.msra.mxu0 %v337
        %415 = vmatprep.subr.mxu0 %v334
        %416 = vmatpush1.msra.mxu0 %v333
        %417 = vmatprep.subr.mxu0 %v330
        %418 = vmatpush1.msra.mxu0 %v329
        %419 = vmatprep.subr.mxu0 %v326
        %420 = vmatpush1.msra.mxu0 %v325
        %421 = vmatprep.subr.mxu0 0.0
        %422 = vmatpush2.msra.mxu0 0.0
        %423 = vmatprep.subr.mxu0 0.0
        %424 = vmatpush2.msra.mxu0 0.0
        %425 = vmatprep.subr.mxu0 0.0
        %426 = vmatpush2.msra.mxu0 0.0
        %427 = vmatprep.subr.mxu0 0.0
        %428 = vmatpush2.msra.mxu0 0.0
        %429 = vmatprep.subr.mxu0 0.0
        %430 = vmatpush2.msra.mxu0 0.0
        %431 = vmatprep.subr.mxu0 0.0
        %432 = vmatpush2.msra.mxu0 0.0
        %433 = vmatprep.subr.mxu0 0.0
        %434 = vmatpush2.msra.mxu0 0.0
        %435 = vmatprep.subr.mxu0 0.0
        %436 = vmatpush2.msra.mxu0 0.0
        %437 = vmatprep.subr.mxu0 0.0
        %438 = vmatpush2.msra.mxu0 0.0
        %439 = vmatprep.subr.mxu0 0.0
        %440 = vmatpush2.msra.mxu0 0.0
        %441 = vmatprep.subr.mxu0 0.0
        %442 = vmatpush2.msra.mxu0 0.0
        %443 = vmatprep.subr.mxu0 0.0
        %444 = vmatpush2.msra.mxu0 0.0
        %445 = vmatprep.subr.mxu0 0.0
        %446 = vmatpush2.msra.mxu0 0.0
        %447 = vmatprep.subr.mxu0 0.0
        %448 = vmatpush2.msra.mxu0 0.0
        %449 = vmatprep.subr.mxu0 0.0
        %450 = vmatpush2.msra.mxu0 0.0
        %451 = vmatprep.subr.mxu0 0.0
        %452 = vmatpush2.msra.mxu0 0.0
        %453 = vmatprep.mubr.f32.mxu0 0.0
        %454 = vmatmul.mubr.f32.gmra.mxu0 %v324
        %v455 = vpop.f32.mrf.mxu0
        %v456 = vadd.f32 0.0, %v455
        %v457 = vpop.f32.mrf.mxu0
        %v458 = vadd.f32 0.0, %v457
        %459 = vdwg.mxu0
        %460 = vmatprep.subr.mxu0 %v388
        %461 = vmatpush1.msra.mxu0 %v387
        %462 = vmatprep.subr.mxu0 %v384
        %463 = vmatpush1.msra.mxu0 %v383
        %464 = vmatprep.subr.mxu0 %v380
        %465 = vmatpush1.msra.mxu0 %v379
        %466 = vmatprep.subr.mxu0 %v376
        %467 = vmatpush1.msra.mxu0 %v375
        %468 = vmatprep.subr.mxu0 %v372
        %469 = vmatpush1.msra.mxu0 %v371
        %470 = vmatprep.subr.mxu0 %v368
        %471 = vmatpush1.msra.mxu0 %v367
        %472 = vmatprep.subr.mxu0 %v364
        %473 = vmatpush1.msra.mxu0 %v363
        %474 = vmatprep.subr.mxu0 %v360
        %475 = vmatpush1.msra.mxu0 %v359
        %476 = vmatprep.subr.mxu0 %v356
        %477 = vmatpush1.msra.mxu0 %v355
        %478 = vmatprep.subr.mxu0 %v352
        %479 = vmatpush1.msra.mxu0 %v351
        %480 = vmatprep.subr.mxu0 %v348
        %481 = vmatpush1.msra.mxu0 %v347
        %482 = vmatprep.subr.mxu0 %v344
        %483 = vmatpush1.msra.mxu0 %v343
        %484 = vmatprep.subr.mxu0 %v340
        %485 = vmatpush1.msra.mxu0 %v339
        %486 = vmatprep.subr.mxu0 %v336
        %487 = vmatpush1.msra.mxu0 %v335
        %488 = vmatprep.subr.mxu0 %v332
        %489 = vmatpush1.msra.mxu0 %v331
        %490 = vmatprep.subr.mxu0 %v328
        %491 = vmatpush1.msra.mxu0 %v327
        %492 = vmatprep.subr.mxu0 0.0
        %493 = vmatpush2.msra.mxu0 0.0
        %494 = vmatprep.subr.mxu0 0.0
        %495 = vmatpush2.msra.mxu0 0.0
        %496 = vmatprep.subr.mxu0 0.0
        %497 = vmatpush2.msra.mxu0 0.0
        %498 = vmatprep.subr.mxu0 0.0
        %499 = vmatpush2.msra.mxu0 0.0
        %500 = vmatprep.subr.mxu0 0.0
        %501 = vmatpush2.msra.mxu0 0.0
        %502 = vmatprep.subr.mxu0 0.0
        %503 = vmatpush2.msra.mxu0 0.0
        %504 = vmatprep.subr.mxu0 0.0
        %505 = vmatpush2.msra.mxu0 0.0
        %506 = vmatprep.subr.mxu0 0.0
        %507 = vmatpush2.msra.mxu0 0.0
        %508 = vmatprep.subr.mxu0 0.0
        %509 = vmatpush2.msra.mxu0 0.0
        %510 = vmatprep.subr.mxu0 0.0
        %511 = vmatpush2.msra.mxu0 0.0
        %512 = vmatprep.subr.mxu0 0.0
        %513 = vmatpush2.msra.mxu0 0.0
        %514 = vmatprep.subr.mxu0 0.0
        %515 = vmatpush2.msra.mxu0 0.0
        %516 = vmatprep.subr.mxu0 0.0
        %517 = vmatpush2.msra.mxu0 0.0
        %518 = vmatprep.subr.mxu0 0.0
        %519 = vmatpush2.msra.mxu0 0.0
        %520 = vmatprep.subr.mxu0 0.0
        %521 = vmatpush2.msra.mxu0 0.0
        %522 = vmatprep.subr.mxu0 0.0
        %523 = vmatpush2.msra.mxu0 0.0
        %524 = vmatprep.mubr.f32.mxu0 0.0
        %525 = vmatmul.mubr.f32.gmra.mxu0 %v324
        %v526 = vpop.f32.mrf.mxu0
        %v527 = vadd.f32 0.0, %v526
        %v528 = vpop.f32.mrf.mxu0
        %v529 = vadd.f32 0.0, %v528
        %530 = vdwg.mxu0
        %531 = vst [vmem:[%s227] sm:$0xff] %v456
        %532 = vst [vmem:[%s227 + $0x8] sm:$0xff] %v458
        %533 = vst [vmem:[%s227 + $0x10] sm:$0xff] %v527
        %534 = vst [vmem:[%s227 + $0x18] sm:$0xff] %v529
        %s535 = sand.u32 %s132, 1
        %s536 = scalar_lea.sflag [#allocation4], %s535
        %s537 = sand.u32 %s132, 1
        %s538 = smul.addr %s537, 32
        %s539 = scalar_lea.vmem [#allocation5], %s538
        // Predicated region
        $region41: #{tpu_custom_call.1} parent=35 // pred_check
          %p540 = pneg %p142
        $region42: #{tpu_custom_call.1} parent=35 // pred_check_branch
          %542 = sbr.rel (%p540) target = $region44
        $region43: #{tpu_custom_call.1} parent=35 // pred_region
          %s543 = smul.u32 4, %s24
          %s545 = ssub.s32 512, 512
          %546 = vsyncadd %s536, %s545
          %s547 = smul.addr %s23, 8
          %s548 = sadd.s32 %s543, %s547
          %s549 = smul.addr %s548, 128
          %s550 = scalar_lea.hbm %s4, %s549
          %s552 = sshll.u32 %s539, 4
          %s553 = int_to_ptr.vmem [resolvable:$true] %s552
          %555 = dma.vmem_to_hbm [thread:$0]  %s553, 512, %s550, %s536
        $region44: #{tpu_custom_call.1} parent=35 // pred_fallthru
          _
      $region36: #{tpu_custom_call.1} parent=5 // pred_fallthru
        _
      %p556 = scmp.le.s32.totalorder 2, %s14
      // Predicated region
      $region45: #{tpu_custom_call.1} parent=5 // pred_check
        %p557 = pneg %p556
      $region46: #{tpu_custom_call.1} parent=5 // pred_check_branch
        %559 = sbr.rel (%p557) target = $region48
      $region47: #{tpu_custom_call.1} parent=5 // pred_region
        %s560 = ssub.s32 %s14, 2
        // Predicated region
        $region49: #{tpu_custom_call.1} parent=47 // pred_check
          %p561 = pneg %p148
        $region50: #{tpu_custom_call.1} parent=47 // pred_check_branch
          %563 = sbr.rel (%p561) target = $region52
        $region51: #{tpu_custom_call.1} parent=47 // pred_region
          %s564 = sand.u32 %s133, 1
          %s565 = scalar_lea.sflag [#allocation4], %s564
          %s566 = sand.u32 %s133, 1
          %s567 = smul.addr %s566, 32
          %s568 = scalar_lea.vmem [#allocation5], %s567
          %569 = dma.done %s565, 512
        $region52: #{tpu_custom_call.1} parent=47 // pred_fallthru
          _
      $region48: #{tpu_custom_call.1} parent=5 // pred_fallthru
        _
    $region6: #{tpu_custom_call.1} parent=1 // loop_footer
      %s18 = sadd.s32 1, %s14
    $region7: #{tpu_custom_call.1} parent=1 // loop_footer_branch
      %13 = sbr.rel target = $region3
    $region8: #{tpu_custom_call.1} parent=1 // loop_exit
      _
    %570 = vsyncpa [#allocation3], 1
    %s571 = scalar_lea.sflag [#allocation3], 1
    %572 = vsyncpa %s571, 1
    %573 = vsyncpa [#allocation4], 1
    %s574 = scalar_lea.sflag [#allocation4], 1
    %575 = vsyncpa %s574, 1

</llo_original>
